<compile_context>
chip_gen: v7x
topology: tpu7x:2x2x1
jax: 0.10.0
libtpu: 0.0.40
codegen_flags: <defaults>
</compile_context>

<pallas_src>
import jax
import jax.numpy as jnp
from jax.experimental import pallas as pl
from jax.experimental.pallas import tpu as pltpu

# ----------------------------- small shapes ---------------------------------
C, H, W = 3, 16, 16          # image channels / spatial (112 -> 16 for test)
HW = H * W                   # 256  (multiple of 128 -> lane dense)
D = C * HW                   # 768  flattened image dim (6 * 128)
FEAT = 128                   # embedder feature dim (512 in real ArcFace)
NIMG = 4                     # img_input .. img_input4
MPAD = 8                     # pad M to one full f32 sublane tile
OUT_LANES = 128              # lane-dense padded logits output
EPS = 1e-12                  # guard for rsqrt (PyTorch norm path has no eps)


# ------------------------------ kernel bodies --------------------------------
def _blend_embed(imgs, patch, mask, w):
    """Blend (approx FaceXZooProjector) then embed on the MXU (bf16 in, f32 acc)."""
    blended = imgs * (1.0 - mask) + patch * mask                     # (MPAD, D) f32
    return jnp.dot(blended.astype(jnp.bfloat16), w,
                   preferred_element_type=jnp.float32)               # (MPAD, FEAT) f32


def init_embed_kernel(imgs_ref, patch_ref, mask_ref, w_ref, feat_ref):
    """Init path: blend the two reference images with the rgb mask and embed."""
    feat_ref[...] = _blend_embed(imgs_ref[...], patch_ref[...],
                                 mask_ref[...], w_ref[...])


def forward_kernel(imgs_ref, patch_ref, mask_ref, w_ref, f1_ref, f2_ref, out_ref):
    """Fused forward: blend -> embed -> get_logits, single kernel."""
    feats = _blend_embed(imgs_ref[...], patch_ref[...],
                         mask_ref[...], w_ref[...])                  # (MPAD, FEAT)
    feats4 = feats[:NIMG]                                            # (4, FEAT) real rows
    f1 = f1_ref[...]                                                 # (1, FEAT)
    f2 = f2_ref[...]                                                 # (1, FEAT)

    # cosine-style sims via rsqrt (EUP) instead of sqrt + divide (VPU)
    inv_norms = jax.lax.rsqrt(
        jnp.sum(feats4 * feats4, axis=-1, keepdims=True) + EPS)      # (4, 1)
    inv_n1 = jax.lax.rsqrt(jnp.sum(f1 * f1) + EPS)
    inv_n2 = jax.lax.rsqrt(jnp.sum(f2 * f2) + EPS)

    dots1 = jnp.sum(feats4 * f1, axis=-1, keepdims=True)             # (4, 1)
    sims1 = dots1 * inv_norms * inv_n1                               # d1, d1_2, d1_3, d1_4
    dd1 = jnp.mean(sims1)

    inv_n0 = jax.lax.rsqrt(jnp.sum(feats4[0:1] * feats4[0:1]) + EPS)
    d2 = jnp.sum(feats4[0:1] * f2) * inv_n0 * inv_n2

    # lane-dense padded output: [dd1, d2, 0, 0, ...] in one (1, 128) vst
    col = jax.lax.broadcasted_iota(jnp.int32, (1, OUT_LANES), 1)
    out_ref[...] = jnp.where(col == 0, dd1, jnp.where(col == 1, d2, 0.0))


# ------------------------------ wrappers --------------------------------------
_COMPILER_PARAMS = pltpu.CompilerParams(dimension_semantics=("arbitrary",))


def _spec(shape):
    return pl.BlockSpec(shape, lambda i: (0, 0))


def init_embed(imgs_pad, patch_flat, mask_flat, w):
    """(MPAD, D) padded slab -> (MPAD, FEAT) features, one call."""
    return pl.pallas_call(
        init_embed_kernel,
        out_shape=jax.ShapeDtypeStruct((MPAD, FEAT), jnp.float32),
        grid=(1,),
        in_specs=[_spec((MPAD, D)), _spec((1, D)), _spec((1, D)),
                  _spec((D, FEAT))],
        out_specs=_spec((MPAD, FEAT)),
        compiler_params=_COMPILER_PARAMS,
    )(imgs_pad, patch_flat, mask_flat, w)


def fused_forward(imgs_pad, patch_flat, mask_flat, w, f1, f2):
    """Fully fused forward pass. Returns (1, 2) logits."""
    out = pl.pallas_call(
        forward_kernel,
        out_shape=jax.ShapeDtypeStruct((1, OUT_LANES), jnp.float32),
        grid=(1,),
        in_specs=[_spec((MPAD, D)), _spec((1, D)), _spec((1, D)),
                  _spec((D, FEAT)), _spec((1, FEAT)), _spec((1, FEAT))],
        out_specs=_spec((1, OUT_LANES)),
        compiler_params=_COMPILER_PARAMS,
    )(imgs_pad, patch_flat, mask_flat, w, f1, f2)
    return out[:, :2]


class NetPallas:
    """JAX/Pallas re-implementation of Net (synthetic, deterministic params)."""

    def __init__(self, key):
        ks = jax.random.split(key, 8)
        # stored face images img_input .. img_input4, flattened + M-padded (8, D)
        imgs4 = jax.random.uniform(ks[0], (NIMG, C, H, W), jnp.float32)
        self.imgs_pad = jnp.concatenate(
            [imgs4.reshape(NIMG, D),
             jnp.zeros((MPAD - NIMG, D), jnp.float32)], axis=0)
        # reference identity images img1 / img2
        img1 = jax.random.uniform(ks[1], (1, C, H, W), jnp.float32)
        img2 = jax.random.uniform(ks[2], (1, C, H, W), jnp.float32)
        # none_mask_t: RGBA mask (1, 4, H, W); pre-flatten once (lane-dense)
        none_mask_t = jax.random.uniform(ks[3], (1, 4, H, W), jnp.float32)
        self.none_mask_rgb_flat = none_mask_t[:, :3].reshape(1, D)           # (1, D)
        uv = none_mask_t[:, 3:4].reshape(1, HW)
        self.uv_mask_flat = jnp.tile(uv, (1, C))                             # (1, D)
        # synthetic embedder weights: bf16 for the MXU (f32 accumulation)
        self.emb_w = (jax.random.normal(ks[4], (D, FEAT), jnp.float32)
                      / jnp.sqrt(jnp.float32(D))).astype(jnp.bfloat16)
        # both reference embeddings (img1_feat / img2_feat) in ONE fused call
        refs_pad = jnp.concatenate(
            [img1.reshape(1, D), img2.reshape(1, D),
             jnp.zeros((MPAD - 2, D), jnp.float32)], axis=0)
        ref_feats = init_embed(refs_pad, self.none_mask_rgb_flat,
                               self.uv_mask_flat, self.emb_w)
        self.img1_feat = ref_feats[0:1]                                      # (1, FEAT)
        self.img2_feat = ref_feats[1:2]                                      # (1, FEAT)

    def __call__(self, x):
        # x: adversarial patch (1, C, H, W) -> flat lane-dense (1, D)
        patch_flat = x.reshape(1, D).astype(jnp.float32)
        return fused_forward(self.imgs_pad, patch_flat, self.uv_mask_flat,
                             self.emb_w, self.img1_feat, self.img2_feat)


# ------------------------------ main -----------------------------------------
if __name__ == "__main__":
    key = jax.random.PRNGKey(0)
    k_net, k_x = jax.random.split(key)
    net = NetPallas(k_net)
    x = jax.random.uniform(k_x, (1, C, H, W), jnp.float32)   # adversarial patch
    out = net(x)
    out = jax.block_until_ready(out)
    assert out.shape == (1, 2) and out.dtype == jnp.float32
    print("KERNEL_OK")
</pallas_src>

<mosaic_0001>
module attributes {stable_mosaic.version = 11 : i64} {
  func.func @init_embed_kernel(%arg0: i32, %arg1: memref<8x768xf32, #tpu.memory_space<vmem>>, %arg2: memref<1x768xf32, #tpu.memory_space<vmem>>, %arg3: memref<1x768xf32, #tpu.memory_space<vmem>>, %arg4: memref<768x128xbf16, #tpu.memory_space<vmem>>, %arg5: memref<8x128xf32, #tpu.memory_space<vmem>>) attributes {dimension_semantics = [#tpu.dimension_semantics<arbitrary>], iteration_bounds = array<i64: 1>, scalar_prefetch = 0 : i64, scratch_operands = 0 : i64, tpu.core_type = #tpu.core_type<tc>, window_params = [{pipeline_mode = #tpu.pipeline_mode<synchronous>, transform_indices = @transform_0, window_bounds = array<i64: 8, 768>}, {pipeline_mode = #tpu.pipeline_mode<synchronous>, transform_indices = @transform_1, window_bounds = array<i64: 1, 768>}, {pipeline_mode = #tpu.pipeline_mode<synchronous>, transform_indices = @transform_2, window_bounds = array<i64: 1, 768>}, {pipeline_mode = #tpu.pipeline_mode<synchronous>, transform_indices = @transform_3, window_bounds = array<i64: 768, 128>}, {pipeline_mode = #tpu.pipeline_mode<synchronous>, transform_indices = @transform_4, window_bounds = array<i64: 8, 128>}]} {
    %c0 = arith.constant 0 : index
    %c0_0 = arith.constant 0 : index
    %0 = vector.load %arg1[%c0, %c0_0] : memref<8x768xf32, #tpu.memory_space<vmem>>, vector<8x768xf32>
    %c0_1 = arith.constant 0 : index
    %c0_2 = arith.constant 0 : index
    %1 = vector.load %arg2[%c0_1, %c0_2] : memref<1x768xf32, #tpu.memory_space<vmem>>, vector<1x768xf32>
    %c0_3 = arith.constant 0 : index
    %c0_4 = arith.constant 0 : index
    %2 = vector.load %arg3[%c0_3, %c0_4] : memref<1x768xf32, #tpu.memory_space<vmem>>, vector<1x768xf32>
    %c0_5 = arith.constant 0 : index
    %c0_6 = arith.constant 0 : index
    %3 = vector.load %arg4[%c0_5, %c0_6] : memref<768x128xbf16, #tpu.memory_space<vmem>>, vector<768x128xbf16>
    %cst = arith.constant 1.000000e+00 : f32
    %4 = vector.broadcast %cst : f32 to vector<1x768xf32>
    %5 = arith.subf %4, %2 : vector<1x768xf32>
    %6 = vector.broadcast %5 : vector<1x768xf32> to vector<8x768xf32>
    %7 = arith.mulf %0, %6 : vector<8x768xf32>
    %8 = arith.mulf %1, %2 : vector<1x768xf32>
    %9 = vector.broadcast %8 : vector<1x768xf32> to vector<8x768xf32>
    %10 = arith.addf %7, %9 : vector<8x768xf32>
    %11 = arith.truncf %10 : vector<8x768xf32> to vector<8x768xbf16>
    %cst_7 = arith.constant dense<0.000000e+00> : vector<8x128xf32>
    %12 = tpu.matmul %11, %3, %cst_7 {dimension_numbers = #tpu.dot_dimension_numbers<[1], [0], [0], [1], [0, 0, 1, 1], [], []>} : vector<8x768xbf16>, vector<768x128xbf16>, vector<8x128xf32> -> vector<8x128xf32>
    %c0_8 = arith.constant 0 : index
    %c0_9 = arith.constant 0 : index
    %13 = vector.load %arg5[%c0_8, %c0_9] : memref<8x128xf32, #tpu.memory_space<vmem>>, vector<8x128xf32>
    tpu.vector_store %arg5[%c0_8, %c0_9], %12 {strides = array<i32>} : memref<8x128xf32, #tpu.memory_space<vmem>>, vector<8x128xf32>,
    return
  }
  func.func @transform_0(%arg0: i32) -> (i32, i32) {
    %c0_i32 = arith.constant 0 : i32
    %c0_i32_0 = arith.constant 0 : i32
    %c0_i32_1 = arith.constant 0 : i32
    return %c0_i32, %c0_i32_0 : i32, i32
  }
  func.func @transform_1(%arg0: i32) -> (i32, i32) {
    %c0_i32 = arith.constant 0 : i32
    %c0_i32_0 = arith.constant 0 : i32
    %c0_i32_1 = arith.constant 0 : i32
    return %c0_i32, %c0_i32_0 : i32, i32
  }
  func.func @transform_2(%arg0: i32) -> (i32, i32) {
    %c0_i32 = arith.constant 0 : i32
    %c0_i32_0 = arith.constant 0 : i32
    %c0_i32_1 = arith.constant 0 : i32
    return %c0_i32, %c0_i32_0 : i32, i32
  }
  func.func @transform_3(%arg0: i32) -> (i32, i32) {
    %c0_i32 = arith.constant 0 : i32
    %c0_i32_0 = arith.constant 0 : i32
    %c0_i32_1 = arith.constant 0 : i32
    return %c0_i32, %c0_i32_0 : i32, i32
  }
  func.func @transform_4(%arg0: i32) -> (i32, i32) {
    %c0_i32 = arith.constant 0 : i32
    %c0_i32_0 = arith.constant 0 : i32
    %c0_i32_1 = arith.constant 0 : i32
    return %c0_i32, %c0_i32_0 : i32, i32
  }
}

</mosaic_0001>

<llo_original>
// kernel: tpu_custom_call.1
$region0: #{tpu_custom_call.1}
  #allocation0 [shape = 'u32[]', space=smem, size = 0x4, offset = 0x4, fixed_abs, tag = 'smem constant byte address 0x4 - core index']
  #allocation1 [shape = 'u32[144,128]{1,0:T(1,128)}', space=vmem, size = 0x12000, scoped, tag = 'internal scratch']
  %s0 = inlined_call_operand.hbm [shape: f32[8,768], index: 0, kind: input, shape index: {}]
  %s1 = inlined_call_operand.hbm [shape: f32[1,768], index: 1, kind: input, shape index: {}]
  %s2 = inlined_call_operand.vmem [shape: f32[1,768], index: 2, kind: input, shape index: {}]
  %s3 = inlined_call_operand.hbm [shape: bf16[768,128], index: 3, kind: input, shape index: {}]
  %s4 = inlined_call_operand.hbm [shape: f32[8,128], index: 4, kind: output, shape index: {}]
  %s5 = sld [smem:[#allocation0]]
  $region38: #{tpu_custom_call.1} parent=0
    _
  %s7 = ssub.s32 1, %s5
  %s8 = scalar_select 0, %s7, %s5
  $region1: #{tpu_custom_call.1} parent=0
    #allocation2 [shape = 'u8[24576]{0}', space=vmem, size = 0x6000, scoped, tag = 'input window, operand 0, single buffered']
    #allocation3 [shape = 's32[1]{0}', space=sflag, size = 0x4, scoped, tag = 'scoped memory for tpu_custom_call.1']
    #allocation4 [shape = 's32[1]{0}', space=sflag, size = 0x4, scoped, tag = 'scoped memory for tpu_custom_call.1']
    #allocation5 [shape = 'u8[3072]{0}', space=vmem, size = 0xc00, scoped, tag = 'input window, operand 1, single buffered']
    #allocation6 [shape = 's32[1]{0}', space=sflag, size = 0x4, scoped, tag = 'scoped memory for tpu_custom_call.1']
    #allocation7 [shape = 'u8[196608]{0}', space=vmem, size = 0x30000, scoped, tag = 'input window, operand 3, single buffered']
    #allocation8 [shape = 'u8[4096]{0}', space=vmem, size = 0x1000, scoped, tag = 'output window, operand 0, single buffered']
    %9 = vsyncpa [#allocation3], 0
    %10 = vsyncpa [#allocation6], 0
    %11 = vsyncpa [#allocation4], 0
    // Predicated region
    $region2: #{tpu_custom_call.1} parent=1 // pred_check
      _
    $region3: #{tpu_custom_call.1} parent=1 // pred_check_branch
      %13 = sbr.rel (0) target = $region5
    $region4: #{tpu_custom_call.1} parent=1 // pred_region
      %s15 = ssub.s32 768, 768
      %16 = vsyncadd [#allocation3], %s15
      %s18 = sshll.u32 [#allocation2], 4
      %s19 = int_to_ptr.vmem [resolvable:$true] %s18
      %21 = dma.hbm_to_vmem [thread:$0]  %s0, 768, %s19, [#allocation3]
    $region5: #{tpu_custom_call.1} parent=1 // pred_fallthru
      _
    // Predicated region
    $region6: #{tpu_custom_call.1} parent=1 // pred_check
      _
    $region7: #{tpu_custom_call.1} parent=1 // pred_check_branch
      %23 = sbr.rel (0) target = $region9
    $region8: #{tpu_custom_call.1} parent=1 // pred_region
      %s25 = ssub.s32 96, 96
      %26 = vsyncadd [#allocation6], %s25
      %s28 = sshll.u32 [#allocation5], 4
      %s29 = int_to_ptr.vmem [resolvable:$true] %s28
      %31 = dma.hbm_to_vmem [thread:$0]  %s1, 96, %s29, [#allocation6]
    $region9: #{tpu_custom_call.1} parent=1 // pred_fallthru
      _
    // Predicated region
    $region10: #{tpu_custom_call.1} parent=1 // pred_check
      _
    $region11: #{tpu_custom_call.1} parent=1 // pred_check_branch
      %33 = sbr.rel (0) target = $region13
    $region12: #{tpu_custom_call.1} parent=1 // pred_region
      _
    $region13: #{tpu_custom_call.1} parent=1 // pred_fallthru
      _
    // Predicated region
    $region14: #{tpu_custom_call.1} parent=1 // pred_check
      _
    $region15: #{tpu_custom_call.1} parent=1 // pred_check_branch
      %35 = sbr.rel (0) target = $region17
    $region16: #{tpu_custom_call.1} parent=1 // pred_region
      %s37 = ssub.s32 6144, 6144
      %38 = vsyncadd [#allocation6], %s37
      %s39 = sshll.u32 [#allocation7], 4
      %s40 = int_to_ptr.vmem [resolvable:$true] %s39
      %45 = dma.hbm_to_vmem [thread:$0]  %s3, 6144, %s40, [#allocation6], 64, 64, 4
    $region17: #{tpu_custom_call.1} parent=1 // pred_fallthru
      _
    // Predicated region
    $region18: #{tpu_custom_call.1} parent=1 // pred_check
      _
    $region19: #{tpu_custom_call.1} parent=1 // pred_check_branch
      %47 = sbr.rel (0) target = $region21
    $region20: #{tpu_custom_call.1} parent=1 // pred_region
      %48 = dma.done [#allocation3], 768
    $region21: #{tpu_custom_call.1} parent=1 // pred_fallthru
      _
    // Predicated region
    $region22: #{tpu_custom_call.1} parent=1 // pred_check
      _
    $region23: #{tpu_custom_call.1} parent=1 // pred_check_branch
      %50 = sbr.rel (0) target = $region25
    $region24: #{tpu_custom_call.1} parent=1 // pred_region
      %51 = dma.done [#allocation6], 96
    $region25: #{tpu_custom_call.1} parent=1 // pred_fallthru
      _
    // Predicated region
    $region26: #{tpu_custom_call.1} parent=1 // pred_check
      _
    $region27: #{tpu_custom_call.1} parent=1 // pred_check_branch
      %53 = sbr.rel (0) target = $region29
    $region28: #{tpu_custom_call.1} parent=1 // pred_region
      %54 = dma.done [#allocation6], 6144
    $region29: #{tpu_custom_call.1} parent=1 // pred_fallthru
      _
    %v56 = vld [vmem:[#allocation2] sm:$0xff]
    %v57 = vld [vmem:[#allocation2 + $0x8] sm:$0xff]
    %v58 = vld [vmem:[#allocation2 + $0x10] sm:$0xff]
    %v59 = vld [vmem:[#allocation2 + $0x18] sm:$0xff]
    %v60 = vld [vmem:[#allocation2 + $0x20] sm:$0xff]
    %v61 = vld [vmem:[#allocation2 + $0x28] sm:$0xff]
    %v62 = vld [vmem:[#allocation5] sm:$0x3f]
    %v63 = vld [vmem:[%s2] sm:$0x3f]
    %v64 = vld [vmem:[#allocation7] sm:$0xf]
    %v65 = vld [vmem:[#allocation7 + $0x4] sm:$0xf]
    %v66 = vld [vmem:[#allocation7 + $0x8] sm:$0xf]
    %v67 = vld [vmem:[#allocation7 + $0xc] sm:$0xf]
    %v68 = vld [vmem:[#allocation7 + $0x10] sm:$0xf]
    %v69 = vld [vmem:[#allocation7 + $0x14] sm:$0xf]
    %v70 = vld [vmem:[#allocation7 + $0x18] sm:$0xf]
    %v71 = vld [vmem:[#allocation7 + $0x1c] sm:$0xf]
    %v72 = vld [vmem:[#allocation7 + $0x20] sm:$0xf]
    %v73 = vld [vmem:[#allocation7 + $0x24] sm:$0xf]
    %v74 = vld [vmem:[#allocation7 + $0x28] sm:$0xf]
    %v75 = vld [vmem:[#allocation7 + $0x2c] sm:$0xf]
    %v76 = vld [vmem:[#allocation7 + $0x30] sm:$0xf]
    %v77 = vld [vmem:[#allocation7 + $0x34] sm:$0xf]
    %v78 = vld [vmem:[#allocation7 + $0x38] sm:$0xf]
    %v79 = vld [vmem:[#allocation7 + $0x3c] sm:$0xf]
    %v80 = vld [vmem:[#allocation7 + $0x40] sm:$0xf]
    %v81 = vld [vmem:[#allocation7 + $0x44] sm:$0xf]
    %v82 = vld [vmem:[#allocation7 + $0x48] sm:$0xf]
    %v83 = vld [vmem:[#allocation7 + $0x4c] sm:$0xf]
    %v84 = vld [vmem:[#allocation7 + $0x50] sm:$0xf]
    %v85 = vld [vmem:[#allocation7 + $0x54] sm:$0xf]
    %v86 = vld [vmem:[#allocation7 + $0x58] sm:$0xf]
    %v87 = vld [vmem:[#allocation7 + $0x5c] sm:$0xf]
    %v88 = vld [vmem:[#allocation7 + $0x60] sm:$0xf]
    %v89 = vld [vmem:[#allocation7 + $0x64] sm:$0xf]
    %v90 = vld [vmem:[#allocation7 + $0x68] sm:$0xf]
    %v91 = vld [vmem:[#allocation7 + $0x6c] sm:$0xf]
    %v92 = vld [vmem:[#allocation7 + $0x70] sm:$0xf]
    %v93 = vld [vmem:[#allocation7 + $0x74] sm:$0xf]
    %v94 = vld [vmem:[#allocation7 + $0x78] sm:$0xf]
    %v95 = vld [vmem:[#allocation7 + $0x7c] sm:$0xf]
    %v96 = vld [vmem:[#allocation7 + $0x80] sm:$0xf]
    %v97 = vld [vmem:[#allocation7 + $0x84] sm:$0xf]
    %v98 = vld [vmem:[#allocation7 + $0x88] sm:$0xf]
    %v99 = vld [vmem:[#allocation7 + $0x8c] sm:$0xf]
    %v100 = vld [vmem:[#allocation7 + $0x90] sm:$0xf]
    %v101 = vld [vmem:[#allocation7 + $0x94] sm:$0xf]
    %v102 = vld [vmem:[#allocation7 + $0x98] sm:$0xf]
    %v103 = vld [vmem:[#allocation7 + $0x9c] sm:$0xf]
    %v104 = vld [vmem:[#allocation7 + $0xa0] sm:$0xf]
    %v105 = vld [vmem:[#allocation7 + $0xa4] sm:$0xf]
    %v106 = vld [vmem:[#allocation7 + $0xa8] sm:$0xf]
    %v107 = vld [vmem:[#allocation7 + $0xac] sm:$0xf]
    %v108 = vld [vmem:[#allocation7 + $0xb0] sm:$0xf]
    %v109 = vld [vmem:[#allocation7 + $0xb4] sm:$0xf]
    %v110 = vld [vmem:[#allocation7 + $0xb8] sm:$0xf]
    %v111 = vld [vmem:[#allocation7 + $0xbc] sm:$0xf]
    %v112 = vld [vmem:[#allocation7 + $0xc0] sm:$0xf]
    %v113 = vld [vmem:[#allocation7 + $0xc4] sm:$0xf]
    %v114 = vld [vmem:[#allocation7 + $0xc8] sm:$0xf]
    %v115 = vld [vmem:[#allocation7 + $0xcc] sm:$0xf]
    %v116 = vld [vmem:[#allocation7 + $0xd0] sm:$0xf]
    %v117 = vld [vmem:[#allocation7 + $0xd4] sm:$0xf]
    %v118 = vld [vmem:[#allocation7 + $0xd8] sm:$0xf]
    %v119 = vld [vmem:[#allocation7 + $0xdc] sm:$0xf]
    %v120 = vld [vmem:[#allocation7 + $0xe0] sm:$0xf]
    %v121 = vld [vmem:[#allocation7 + $0xe4] sm:$0xf]
    %v122 = vld [vmem:[#allocation7 + $0xe8] sm:$0xf]
    %v123 = vld [vmem:[#allocation7 + $0xec] sm:$0xf]
    %v124 = vld [vmem:[#allocation7 + $0xf0] sm:$0xf]
    %v125 = vld [vmem:[#allocation7 + $0xf4] sm:$0xf]
    %v126 = vld [vmem:[#allocation7 + $0xf8] sm:$0xf]
    %v127 = vld [vmem:[#allocation7 + $0xfc] sm:$0xf]
    %v128 = vld [vmem:[#allocation7 + $0x100] sm:$0xf]
    %v129 = vld [vmem:[#allocation7 + $0x104] sm:$0xf]
    %v130 = vld [vmem:[#allocation7 + $0x108] sm:$0xf]
    %v131 = vld [vmem:[#allocation7 + $0x10c] sm:$0xf]
    %v132 = vld [vmem:[#allocation7 + $0x110] sm:$0xf]
    %v133 = vld [vmem:[#allocation7 + $0x114] sm:$0xf]
    %v134 = vld [vmem:[#allocation7 + $0x118] sm:$0xf]
    %v135 = vld [vmem:[#allocation7 + $0x11c] sm:$0xf]
    %v136 = vld [vmem:[#allocation7 + $0x120] sm:$0xf]
    %v137 = vld [vmem:[#allocation7 + $0x124] sm:$0xf]
    %v138 = vld [vmem:[#allocation7 + $0x128] sm:$0xf]
    %v139 = vld [vmem:[#allocation7 + $0x12c] sm:$0xf]
    %v140 = vld [vmem:[#allocation7 + $0x130] sm:$0xf]
    %v141 = vld [vmem:[#allocation7 + $0x134] sm:$0xf]
    %v142 = vld [vmem:[#allocation7 + $0x138] sm:$0xf]
    %v143 = vld [vmem:[#allocation7 + $0x13c] sm:$0xf]
    %v144 = vld [vmem:[#allocation7 + $0x140] sm:$0xf]
    %v145 = vld [vmem:[#allocation7 + $0x144] sm:$0xf]
    %v146 = vld [vmem:[#allocation7 + $0x148] sm:$0xf]
    %v147 = vld [vmem:[#allocation7 + $0x14c] sm:$0xf]
    %v148 = vld [vmem:[#allocation7 + $0x150] sm:$0xf]
    %v149 = vld [vmem:[#allocation7 + $0x154] sm:$0xf]
    %v150 = vld [vmem:[#allocation7 + $0x158] sm:$0xf]
    %v151 = vld [vmem:[#allocation7 + $0x15c] sm:$0xf]
    %v152 = vld [vmem:[#allocation7 + $0x160] sm:$0xf]
    %v153 = vld [vmem:[#allocation7 + $0x164] sm:$0xf]
    %v154 = vld [vmem:[#allocation7 + $0x168] sm:$0xf]
    %v155 = vld [vmem:[#allocation7 + $0x16c] sm:$0xf]
    %v156 = vld [vmem:[#allocation7 + $0x170] sm:$0xf]
    %v157 = vld [vmem:[#allocation7 + $0x174] sm:$0xf]
    %v158 = vld [vmem:[#allocation7 + $0x178] sm:$0xf]
    %v159 = vld [vmem:[#allocation7 + $0x17c] sm:$0xf]
    %v160 = vsub.f32 1.0, %v63
    %v162 = vlaneseq
    %v163 = vshrl.u32 %v162, 7
    %v164 = vsub.s32 0, %v163
    %v165 = vrot.slane %v160, %v164
    %v166 = vlaneseq
    %v167 = vshrl.u32 %v166, 7
    %v168 = vsub.s32 1, %v167
    %v169 = vrot.slane %v160, %v168
    %v170 = vlaneseq
    %v171 = vshrl.u32 %v170, 7
    %v172 = vsub.s32 2, %v171
    %v173 = vrot.slane %v160, %v172
    %v174 = vlaneseq
    %v175 = vshrl.u32 %v174, 7
    %v176 = vsub.s32 3, %v175
    %v177 = vrot.slane %v160, %v176
    %v178 = vlaneseq
    %v179 = vshrl.u32 %v178, 7
    %v180 = vsub.s32 4, %v179
    %v181 = vrot.slane %v160, %v180
    %v182 = vlaneseq
    %v183 = vshrl.u32 %v182, 7
    %v184 = vsub.s32 5, %v183
    %v185 = vrot.slane %v160, %v184
    %v192 = vmul.f32 %v56, %v165
    %v193 = vmul.f32 %v57, %v169
    %v194 = vmul.f32 %v58, %v173
    %v195 = vmul.f32 %v59, %v177
    %v196 = vmul.f32 %v60, %v181
    %v197 = vmul.f32 %v61, %v185
    %v198 = vmul.f32 %v62, %v63
    %v200 = vlaneseq
    %v201 = vshrl.u32 %v200, 7
    %v202 = vsub.s32 0, %v201
    %v203 = vrot.slane %v198, %v202
    %v204 = vlaneseq
    %v205 = vshrl.u32 %v204, 7
    %v206 = vsub.s32 1, %v205
    %v207 = vrot.slane %v198, %v206
    %v208 = vlaneseq
    %v209 = vshrl.u32 %v208, 7
    %v210 = vsub.s32 2, %v209
    %v211 = vrot.slane %v198, %v210
    %v212 = vlaneseq
    %v213 = vshrl.u32 %v212, 7
    %v214 = vsub.s32 3, %v213
    %v215 = vrot.slane %v198, %v214
    %v216 = vlaneseq
    %v217 = vshrl.u32 %v216, 7
    %v218 = vsub.s32 4, %v217
    %v219 = vrot.slane %v198, %v218
    %v220 = vlaneseq
    %v221 = vshrl.u32 %v220, 7
    %v222 = vsub.s32 5, %v221
    %v223 = vrot.slane %v198, %v222
    %v230 = vadd.f32 %v192, %v203
    %v231 = vadd.f32 %v193, %v207
    %v232 = vadd.f32 %v194, %v211
    %v233 = vadd.f32 %v195, %v215
    %v234 = vadd.f32 %v196, %v219
    %v235 = vadd.f32 %v197, %v223
    %v236 = vpack.c.bf16 %v230, %v230
    %v237 = vpack.c.bf16 %v231, %v231
    %v238 = vpack.c.bf16 %v232, %v232
    %v239 = vpack.c.bf16 %v233, %v233
    %v240 = vpack.c.bf16 %v234, %v234
    %v241 = vpack.c.bf16 %v235, %v235
    %v338 = vunpack.c.l.b16 %v64
    %v339 = vunpack.c.l.b16 %v65
    %v340 = vunpack.c.l.b16 %v66
    %v341 = vunpack.c.l.b16 %v67
    %v342 = vunpack.c.l.b16 %v68
    %v343 = vunpack.c.l.b16 %v69
    %v344 = vunpack.c.l.b16 %v70
    %v345 = vunpack.c.l.b16 %v71
    %v346 = vunpack.c.l.b16 %v72
    %v347 = vunpack.c.l.b16 %v73
    %v348 = vunpack.c.l.b16 %v74
    %v349 = vunpack.c.l.b16 %v75
    %v350 = vunpack.c.l.b16 %v76
    %v351 = vunpack.c.l.b16 %v77
    %v352 = vunpack.c.l.b16 %v78
    %v353 = vunpack.c.l.b16 %v79
    %v354 = vunpack.c.l.b16 %v80
    %v355 = vunpack.c.l.b16 %v81
    %v356 = vunpack.c.l.b16 %v82
    %v357 = vunpack.c.l.b16 %v83
    %v358 = vunpack.c.l.b16 %v84
    %v359 = vunpack.c.l.b16 %v85
    %v360 = vunpack.c.l.b16 %v86
    %v361 = vunpack.c.l.b16 %v87
    %v362 = vunpack.c.l.b16 %v88
    %v363 = vunpack.c.l.b16 %v89
    %v364 = vunpack.c.l.b16 %v90
    %v365 = vunpack.c.l.b16 %v91
    %v366 = vunpack.c.l.b16 %v92
    %v367 = vunpack.c.l.b16 %v93
    %v368 = vunpack.c.l.b16 %v94
    %v369 = vunpack.c.l.b16 %v95
    %v370 = vunpack.c.l.b16 %v96
    %v371 = vunpack.c.l.b16 %v97
    %v372 = vunpack.c.l.b16 %v98
    %v373 = vunpack.c.l.b16 %v99
    %v374 = vunpack.c.l.b16 %v100
    %v375 = vunpack.c.l.b16 %v101
    %v376 = vunpack.c.l.b16 %v102
    %v377 = vunpack.c.l.b16 %v103
    %v378 = vunpack.c.l.b16 %v104
    %v379 = vunpack.c.l.b16 %v105
    %v380 = vunpack.c.l.b16 %v106
    %v381 = vunpack.c.l.b16 %v107
    %v382 = vunpack.c.l.b16 %v108
    %v383 = vunpack.c.l.b16 %v109
    %v384 = vunpack.c.l.b16 %v110
    %v385 = vunpack.c.l.b16 %v111
    %v386 = vunpack.c.l.b16 %v112
    %v387 = vunpack.c.l.b16 %v113
    %v388 = vunpack.c.l.b16 %v114
    %v389 = vunpack.c.l.b16 %v115
    %v390 = vunpack.c.l.b16 %v116
    %v391 = vunpack.c.l.b16 %v117
    %v392 = vunpack.c.l.b16 %v118
    %v393 = vunpack.c.l.b16 %v119
    %v394 = vunpack.c.l.b16 %v120
    %v395 = vunpack.c.l.b16 %v121
    %v396 = vunpack.c.l.b16 %v122
    %v397 = vunpack.c.l.b16 %v123
    %v398 = vunpack.c.l.b16 %v124
    %v399 = vunpack.c.l.b16 %v125
    %v400 = vunpack.c.l.b16 %v126
    %v401 = vunpack.c.l.b16 %v127
    %v402 = vunpack.c.l.b16 %v128
    %v403 = vunpack.c.l.b16 %v129
    %v404 = vunpack.c.l.b16 %v130
    %v405 = vunpack.c.l.b16 %v131
    %v406 = vunpack.c.l.b16 %v132
    %v407 = vunpack.c.l.b16 %v133
    %v408 = vunpack.c.l.b16 %v134
    %v409 = vunpack.c.l.b16 %v135
    %v410 = vunpack.c.l.b16 %v136
    %v411 = vunpack.c.l.b16 %v137
    %v412 = vunpack.c.l.b16 %v138
    %v413 = vunpack.c.l.b16 %v139
    %v414 = vunpack.c.l.b16 %v140
    %v415 = vunpack.c.l.b16 %v141
    %v416 = vunpack.c.l.b16 %v142
    %v417 = vunpack.c.l.b16 %v143
    %v418 = vunpack.c.l.b16 %v144
    %v419 = vunpack.c.l.b16 %v145
    %v420 = vunpack.c.l.b16 %v146
    %v421 = vunpack.c.l.b16 %v147
    %v422 = vunpack.c.l.b16 %v148
    %v423 = vunpack.c.l.b16 %v149
    %v424 = vunpack.c.l.b16 %v150
    %v425 = vunpack.c.l.b16 %v151
    %v426 = vunpack.c.l.b16 %v152
    %v427 = vunpack.c.l.b16 %v153
    %v428 = vunpack.c.l.b16 %v154
    %v429 = vunpack.c.l.b16 %v155
    %v430 = vunpack.c.l.b16 %v156
    %v431 = vunpack.c.l.b16 %v157
    %v432 = vunpack.c.l.b16 %v158
    %v433 = vunpack.c.l.b16 %v159
    %v434 = vpack.c.b16 %v339, %v338
    %v435 = vpack.c.b16 %v341, %v340
    %v436 = vpack.c.b16 %v343, %v342
    %v437 = vpack.c.b16 %v345, %v344
    %v438 = vpack.c.b16 %v347, %v346
    %v439 = vpack.c.b16 %v349, %v348
    %v440 = vpack.c.b16 %v351, %v350
    %v441 = vpack.c.b16 %v353, %v352
    %v442 = vpack.c.b16 %v355, %v354
    %v443 = vpack.c.b16 %v357, %v356
    %v444 = vpack.c.b16 %v359, %v358
    %v445 = vpack.c.b16 %v361, %v360
    %v446 = vpack.c.b16 %v363, %v362
    %v447 = vpack.c.b16 %v365, %v364
    %v448 = vpack.c.b16 %v367, %v366
    %v449 = vpack.c.b16 %v369, %v368
    %v450 = vpack.c.b16 %v371, %v370
    %v451 = vpack.c.b16 %v373, %v372
    %v452 = vpack.c.b16 %v375, %v374
    %v453 = vpack.c.b16 %v377, %v376
    %v454 = vpack.c.b16 %v379, %v378
    %v455 = vpack.c.b16 %v381, %v380
    %v456 = vpack.c.b16 %v383, %v382
    %v457 = vpack.c.b16 %v385, %v384
    %v458 = vpack.c.b16 %v387, %v386
    %v459 = vpack.c.b16 %v389, %v388
    %v460 = vpack.c.b16 %v391, %v390
    %v461 = vpack.c.b16 %v393, %v392
    %v462 = vpack.c.b16 %v395, %v394
    %v463 = vpack.c.b16 %v397, %v396
    %v464 = vpack.c.b16 %v399, %v398
    %v465 = vpack.c.b16 %v401, %v400
    %v466 = vpack.c.b16 %v403, %v402
    %v467 = vpack.c.b16 %v405, %v404
    %v468 = vpack.c.b16 %v407, %v406
    %v469 = vpack.c.b16 %v409, %v408
    %v470 = vpack.c.b16 %v411, %v410
    %v471 = vpack.c.b16 %v413, %v412
    %v472 = vpack.c.b16 %v415, %v414
    %v473 = vpack.c.b16 %v417, %v416
    %v474 = vpack.c.b16 %v419, %v418
    %v475 = vpack.c.b16 %v421, %v420
    %v476 = vpack.c.b16 %v423, %v422
    %v477 = vpack.c.b16 %v425, %v424
    %v478 = vpack.c.b16 %v427, %v426
    %v479 = vpack.c.b16 %v429, %v428
    %v480 = vpack.c.b16 %v431, %v430
    %v481 = vpack.c.b16 %v433, %v432
    %530 = vmatprep.subr.bf16.mxu0 0
    %531 = vmatpush1.bf16.msra.mxu0 %v434
    %532 = vmatprep.subr.bf16.mxu0 0
    %533 = vmatpush1.bf16.msra.mxu0 %v435
    %534 = vmatprep.subr.bf16.mxu0 0
    %535 = vmatpush1.bf16.msra.mxu0 %v436
    %536 = vmatprep.subr.bf16.mxu0 0
    %537 = vmatpush1.bf16.msra.mxu0 %v437
    %538 = vmatprep.subr.bf16.mxu0 0
    %539 = vmatpush1.bf16.msra.mxu0 %v438
    %540 = vmatprep.subr.bf16.mxu0 0
    %541 = vmatpush1.bf16.msra.mxu0 %v439
    %542 = vmatprep.subr.bf16.mxu0 0
    %543 = vmatpush1.bf16.msra.mxu0 %v440
    %544 = vmatprep.subr.bf16.mxu0 0
    %545 = vmatpush1.bf16.msra.mxu0 %v441
    %546 = vmatprep.subr.bf16.mxu0 0
    %547 = vmatpush1.bf16.msra.mxu0 %v442
    %548 = vmatprep.subr.bf16.mxu0 0
    %549 = vmatpush1.bf16.msra.mxu0 %v443
    %550 = vmatprep.subr.bf16.mxu0 0
    %551 = vmatpush1.bf16.msra.mxu0 %v444
    %552 = vmatprep.subr.bf16.mxu0 0
    %553 = vmatpush1.bf16.msra.mxu0 %v445
    %554 = vmatprep.subr.bf16.mxu0 0
    %555 = vmatpush1.bf16.msra.mxu0 %v446
    %556 = vmatprep.subr.bf16.mxu0 0
    %557 = vmatpush1.bf16.msra.mxu0 %v447
    %558 = vmatprep.subr.bf16.mxu0 0
    %559 = vmatpush1.bf16.msra.mxu0 %v448
    %560 = vmatprep.subr.bf16.mxu0 0
    %561 = vmatpush1.bf16.msra.mxu0 %v449
    %562 = vmatprep.mubr.bf16.mxu0 %v237
    %563 = vmatmul.mubr.bf16.gmra.mrb[0].mxu0 %v236
    %v564 = vpop.f32.mrb[0].mxu0
    %v565 = vadd.f32 0.0, %v564
    %v566 = vpop.f32.mrb[0].mxu0
    %v567 = vpop.f32.mrb[0].mxu0
    %v568 = vpop.f32.mrb[0].mxu0
    %569 = vdwg.mxu0
    %570 = vmatprep.subr.bf16.mxu0 0
    %571 = vmatpush1.bf16.msra.mxu0 %v450
    %572 = vmatprep.subr.bf16.mxu0 0
    %573 = vmatpush1.bf16.msra.mxu0 %v451
    %574 = vmatprep.subr.bf16.mxu0 0
    %575 = vmatpush1.bf16.msra.mxu0 %v452
    %576 = vmatprep.subr.bf16.mxu0 0
    %577 = vmatpush1.bf16.msra.mxu0 %v453
    %578 = vmatprep.subr.bf16.mxu0 0
    %579 = vmatpush1.bf16.msra.mxu0 %v454
    %580 = vmatprep.subr.bf16.mxu0 0
    %581 = vmatpush1.bf16.msra.mxu0 %v455
    %582 = vmatprep.subr.bf16.mxu0 0
    %583 = vmatpush1.bf16.msra.mxu0 %v456
    %584 = vmatprep.subr.bf16.mxu0 0
    %585 = vmatpush1.bf16.msra.mxu0 %v457
    %586 = vmatprep.subr.bf16.mxu0 0
    %587 = vmatpush1.bf16.msra.mxu0 %v458
    %588 = vmatprep.subr.bf16.mxu0 0
    %589 = vmatpush1.bf16.msra.mxu0 %v459
    %590 = vmatprep.subr.bf16.mxu0 0
    %591 = vmatpush1.bf16.msra.mxu0 %v460
    %592 = vmatprep.subr.bf16.mxu0 0
    %593 = vmatpush1.bf16.msra.mxu0 %v461
    %594 = vmatprep.subr.bf16.mxu0 0
    %595 = vmatpush1.bf16.msra.mxu0 %v462
    %596 = vmatprep.subr.bf16.mxu0 0
    %597 = vmatpush1.bf16.msra.mxu0 %v463
    %598 = vmatprep.subr.bf16.mxu0 0
    %599 = vmatpush1.bf16.msra.mxu0 %v464
    %600 = vmatprep.subr.bf16.mxu0 0
    %601 = vmatpush1.bf16.msra.mxu0 %v465
    %602 = vmatprep.mubr.bf16.mxu0 %v239
    %603 = vmatmul.mubr.bf16.gmra.mrb[0].mxu0 %v238
    %v604 = vpop.f32.mrb[0].mxu0
    %v605 = vadd.f32 %v565, %v604
    %v606 = vpop.f32.mrb[0].mxu0
    %v607 = vpop.f32.mrb[0].mxu0
    %v608 = vpop.f32.mrb[0].mxu0
    %609 = vdwg.mxu0
    %610 = vmatprep.subr.bf16.mxu0 0
    %611 = vmatpush1.bf16.msra.mxu0 %v466
    %612 = vmatprep.subr.bf16.mxu0 0
    %613 = vmatpush1.bf16.msra.mxu0 %v467
    %614 = vmatprep.subr.bf16.mxu0 0
    %615 = vmatpush1.bf16.msra.mxu0 %v468
    %616 = vmatprep.subr.bf16.mxu0 0
    %617 = vmatpush1.bf16.msra.mxu0 %v469
    %618 = vmatprep.subr.bf16.mxu0 0
    %619 = vmatpush1.bf16.msra.mxu0 %v470
    %620 = vmatprep.subr.bf16.mxu0 0
    %621 = vmatpush1.bf16.msra.mxu0 %v471
    %622 = vmatprep.subr.bf16.mxu0 0
    %623 = vmatpush1.bf16.msra.mxu0 %v472
    %624 = vmatprep.subr.bf16.mxu0 0
    %625 = vmatpush1.bf16.msra.mxu0 %v473
    %626 = vmatprep.subr.bf16.mxu0 0
    %627 = vmatpush1.bf16.msra.mxu0 %v474
    %628 = vmatprep.subr.bf16.mxu0 0
    %629 = vmatpush1.bf16.msra.mxu0 %v475
    %630 = vmatprep.subr.bf16.mxu0 0
    %631 = vmatpush1.bf16.msra.mxu0 %v476
    %632 = vmatprep.subr.bf16.mxu0 0
    %633 = vmatpush1.bf16.msra.mxu0 %v477
    %634 = vmatprep.subr.bf16.mxu0 0
    %635 = vmatpush1.bf16.msra.mxu0 %v478
    %636 = vmatprep.subr.bf16.mxu0 0
    %637 = vmatpush1.bf16.msra.mxu0 %v479
    %638 = vmatprep.subr.bf16.mxu0 0
    %639 = vmatpush1.bf16.msra.mxu0 %v480
    %640 = vmatprep.subr.bf16.mxu0 0
    %641 = vmatpush1.bf16.msra.mxu0 %v481
    %642 = vmatprep.mubr.bf16.mxu0 %v241
    %643 = vmatmul.mubr.bf16.gmra.mrb[0].mxu0 %v240
    %v644 = vpop.f32.mrb[0].mxu0
    %v645 = vadd.f32 %v605, %v644
    %v646 = vpop.f32.mrb[0].mxu0
    %v647 = vpop.f32.mrb[0].mxu0
    %v648 = vpop.f32.mrb[0].mxu0
    %649 = vdwg.mxu0
    %650 = vst [vmem:[#allocation8] sm:$0xff] %v645
    // Predicated region
    $region30: #{tpu_custom_call.1} parent=1 // pred_check
      _
    $region31: #{tpu_custom_call.1} parent=1 // pred_check_branch
      %652 = sbr.rel (0) target = $region33
    $region32: #{tpu_custom_call.1} parent=1 // pred_region
      %s654 = ssub.s32 128, 128
      %655 = vsyncadd [#allocation4], %s654
      %s657 = sshll.u32 [#allocation8], 4
      %s658 = int_to_ptr.vmem [resolvable:$true] %s657
      %660 = dma.vmem_to_hbm [thread:$0]  %s658, 128, %s4, [#allocation4]
    $region33: #{tpu_custom_call.1} parent=1 // pred_fallthru
      _
    // Predicated region
    $region34: #{tpu_custom_call.1} parent=1 // pred_check
      _
    $region35: #{tpu_custom_call.1} parent=1 // pred_check_branch
      %662 = sbr.rel (0) target = $region37
    $region36: #{tpu_custom_call.1} parent=1 // pred_region
      %663 = dma.done [#allocation4], 128
    $region37: #{tpu_custom_call.1} parent=1 // pred_fallthru
      _
    %664 = vsyncpa [#allocation3], 1
    %665 = vsyncpa [#allocation6], 1
    %666 = vsyncpa [#allocation4], 1

</llo_original>
